<compile_context>
chip_gen: v7x
topology: tpu7x:2x2x1
jax: 0.10.0
libtpu: 0.0.40
codegen_flags: <defaults>
</compile_context>

<pallas_src>
import functools

import jax
import jax.numpy as jnp
from jax.experimental import pallas as pl
from jax.experimental.pallas import tpu as pltpu

_LANE = 128
_SUB = 8
_MAX_BLOCK_ROWS = 4096   # (4096,128) f32 = 2 MiB/block; 2 in x 2 bufs = 8 MiB VMEM
_NCORES = 2              # parallel grid axis (megacore / v7x dual TensorCore)


def _round_up(x, m):
    return ((x + m - 1) // m) * m


def _cdiv(a, b):
    return -(-a // b)


# ----------------------------------------------------------------------------- kernel
def _combo_sums_kernel(p_ref, t_ref, acc_ref, *, inverse, n_valid, block_rows,
                       needs_mask):
    """Accumulate per-block MSE / NLL term sums into an (8,128) vector accumulator."""
    c = pl.program_id(0)   # parallel slice
    i = pl.program_id(1)   # sequential accumulation axis

    @pl.when(i == 0)
    def _():
        acc_ref[...] = jnp.zeros_like(acc_ref)

    p = p_ref[...].astype(jnp.float32)
    t = t_ref[...].astype(jnp.float32)

    if inverse:
        inv_p = 1.0 / p
        diff = inv_p - t
        mse_t = diff * diff
        nll_t = t * p - jnp.log(p)
    else:
        diff = p - t
        mse_t = diff * diff
        nll_t = t / p + jnp.log(p)

    if needs_mask:
        # Mask padded tail (pad values were chosen finite: preds=1, targets=0).
        block_idx = c * pl.num_programs(1) + i
        row0 = block_idx * block_rows
        rows_iota = jax.lax.broadcasted_iota(jnp.int32, mse_t.shape, 0)
        cols_iota = jax.lax.broadcasted_iota(jnp.int32, mse_t.shape, 1)
        flat = (row0 + rows_iota) * _LANE + cols_iota
        valid = flat < n_valid
        mse_t = jnp.where(valid, mse_t, 0.0)
        nll_t = jnp.where(valid, nll_t, 0.0)

    # (block_rows, 128) -> (8, 128) via vreg-wise adds on the VPU; the final
    # cross-lane/sublane reduce to a scalar happens once, outside the kernel.
    mse_part = jnp.sum(mse_t.reshape(block_rows // _SUB, _SUB, _LANE), axis=0)
    nll_part = jnp.sum(nll_t.reshape(block_rows // _SUB, _SUB, _LANE), axis=0)

    acc_ref[0, 0, :, :] = acc_ref[0, 0, :, :] + mse_part
    acc_ref[0, 1, :, :] = acc_ref[0, 1, :, :] + nll_part


# ----------------------------------------------------------------------------- wrapper
def _combo_means_impl(preds, targets, is_modeling_inverse):
    """Returns (mean_mse_terms, mean_nll_terms) as f32 device scalars."""
    n = preds.size
    p = preds.reshape(-1)
    t = targets.reshape(-1)

    rows = _cdiv(n, _LANE)
    block_rows = min(_MAX_BLOCK_ROWS, _round_up(rows, _SUB))
    total_blocks = _cdiv(rows, block_rows)
    steps_per_core = _cdiv(total_blocks, _NCORES)
    padded_rows = _NCORES * steps_per_core * block_rows
    n_pad = padded_rows * _LANE
    needs_mask = (n_pad != n)

    if needs_mask:
        # Finite padding (preds=1 -> log(1)=0, no div-by-zero); masked in-kernel.
        p = jnp.concatenate([p, jnp.ones((n_pad - n,), dtype=p.dtype)])
        t = jnp.concatenate([t, jnp.zeros((n_pad - n,), dtype=t.dtype)])

    # Keep native dtype (bf16 stays bf16 in HBM); kernel upcasts per block.
    p2 = p.reshape(padded_rows, _LANE)
    t2 = t.reshape(padded_rows, _LANE)

    kernel = functools.partial(
        _combo_sums_kernel,
        inverse=bool(is_modeling_inverse),
        n_valid=n,
        block_rows=block_rows,
        needs_mask=needs_mask,
    )

    in_map = lambda c, i: (c * steps_per_core + i, 0)

    partials = pl.pallas_call(
        kernel,
        out_shape=jax.ShapeDtypeStruct((_NCORES, 2, _SUB, _LANE), jnp.float32),
        grid_spec=pltpu.PrefetchScalarGridSpec(
            num_scalar_prefetch=0,
            grid=(_NCORES, steps_per_core),
            in_specs=[
                pl.BlockSpec((block_rows, _LANE), in_map),
                pl.BlockSpec((block_rows, _LANE), in_map),
            ],
            out_specs=pl.BlockSpec((1, 2, _SUB, _LANE), lambda c, i: (c, 0, 0, 0)),
        ),
        compiler_params=pltpu.CompilerParams(
            dimension_semantics=("parallel", "arbitrary"),
        ),
    )(p2, t2)

    sums = jnp.sum(partials, axis=(0, 2, 3))      # (2,) = [sum_mse, sum_nll]
    inv_n = jnp.float32(1.0 / n)
    return sums[0] * inv_n, sums[1] * inv_n


# Differentiable wrapper: forward via Pallas, analytic backward in plain jnp.
@functools.partial(jax.custom_vjp, nondiff_argnums=(2,))
def _combo_means(preds, targets, is_modeling_inverse):
    return _combo_means_impl(preds, targets, is_modeling_inverse)


def _combo_means_fwd(preds, targets, is_modeling_inverse):
    return _combo_means_impl(preds, targets, is_modeling_inverse), (preds, targets)


def _combo_means_bwd(is_modeling_inverse, res, cots):
    preds, targets = res
    g_mse, g_nll = cots
    n = preds.size
    p = preds.astype(jnp.float32)
    t = targets.astype(jnp.float32)
    if is_modeling_inverse:
        inv_p = 1.0 / p
        d_mse_dp = -2.0 * (inv_p - t) * inv_p * inv_p
        d_mse_dt = -2.0 * (inv_p - t)
        d_nll_dp = t - inv_p
        d_nll_dt = p
    else:
        d_mse_dp = 2.0 * (p - t)
        d_mse_dt = -2.0 * (p - t)
        d_nll_dp = -t / (p * p) + 1.0 / p
        d_nll_dt = 1.0 / p
    scale = jnp.float32(1.0 / n)
    gp = (g_mse * d_mse_dp + g_nll * d_nll_dp) * scale
    gt = (g_mse * d_mse_dt + g_nll * d_nll_dt) * scale
    return gp.astype(preds.dtype), gt.astype(targets.dtype)


_combo_means.defvjp(_combo_means_fwd, _combo_means_bwd)


def static_combo_loss(preds, targets, *, is_modeling_inverse=False,
                      w_MSE=None, w_NLL=None, w_min=0.05):
    """Functional equivalent of StaticComboLoss.forward (hot path in Pallas).

    Returns (loss, (w_MSE, w_NLL)); loss is a traced device scalar (differentiable,
    with the dynamic weights stop_gradient'd like the reference's .detach()).
    """
    loss_from_mse, loss_from_nll = _combo_means(preds, targets, bool(is_modeling_inverse))

    if w_MSE is None and w_NLL is None:
        # Dynamic weights, computed entirely on device (no host sync).
        normalizer = loss_from_mse + loss_from_nll
        w_mse0 = jax.lax.stop_gradient(loss_from_nll / normalizer)
        w_nll0 = jax.lax.stop_gradient(loss_from_mse / normalizer)
        w_mse_clamped = jnp.maximum(jnp.float32(w_min), w_mse0)
        w_nll_clamped = jnp.maximum(jnp.float32(w_min), w_nll0)
        take_mse_branch = w_mse0 <= w_nll0
        w_MSE = jnp.where(take_mse_branch, w_mse_clamped, 1.0 - w_nll_clamped)
        w_NLL = jnp.where(take_mse_branch, 1.0 - w_mse_clamped, w_nll_clamped)
        # TODO(synk): the reference also caches the weights on the module via setattr;
        # here they are returned as values instead (stateless functional API).

    loss = w_MSE * loss_from_mse + w_NLL * loss_from_nll
    return loss, (w_MSE, w_NLL)


# ----------------------------------------------------------------------------- reference
def _reference_loss(preds, targets, *, is_modeling_inverse=False,
                    w_MSE=None, w_NLL=None, w_min=0.05):
    """Pure-JAX reference (differentiable) for correctness checks."""
    p = preds.astype(jnp.float32)
    t = targets.astype(jnp.float32)
    if is_modeling_inverse:
        mse = jnp.mean((1.0 / p - t) ** 2)
        nll = jnp.mean(t * p - jnp.log(p))
    else:
        mse = jnp.mean((p - t) ** 2)
        nll = jnp.mean(t / p + jnp.log(p))
    if w_MSE is None and w_NLL is None:
        norm = mse + nll
        w_mse0 = jax.lax.stop_gradient(nll / norm)
        w_nll0 = jax.lax.stop_gradient(mse / norm)
        cond = w_mse0 <= w_nll0
        w_mse_c = jnp.maximum(jnp.float32(w_min), w_mse0)
        w_nll_c = jnp.maximum(jnp.float32(w_min), w_nll0)
        w_MSE = jnp.where(cond, w_mse_c, 1.0 - w_nll_c)
        w_NLL = jnp.where(cond, 1.0 - w_mse_c, w_nll_c)
    return w_MSE * mse + w_NLL * nll


if __name__ == "__main__":
    key = jax.random.PRNGKey(0)
    k1, k2, k3, k4 = jax.random.split(key, 4)

    # preds play the role of predicted variances (positive); targets are squared residuals.
    shape = (2, 4, 16, 16)   # 2048 elements (ragged vs. the large block -> masked path)
    preds = jnp.exp(0.3 * jax.random.normal(k1, shape, dtype=jnp.float32)) + 0.1
    targets = jnp.square(jax.random.normal(k2, shape, dtype=jnp.float32)) + 0.05

    # default (non-inverse), dynamic weights
    loss, _ = static_combo_loss(preds, targets)
    loss = jax.block_until_ready(loss)
    ref = _reference_loss(preds, targets)
    assert jnp.allclose(loss, ref, rtol=1e-4, atol=1e-5), (float(loss), float(ref))

    # inverse path
    loss_inv, _ = static_combo_loss(preds, targets, is_modeling_inverse=True)
    jax.block_until_ready(loss_inv)
    ref_inv = _reference_loss(preds, targets, is_modeling_inverse=True)
    assert jnp.allclose(loss_inv, ref_inv, rtol=1e-4, atol=1e-5), (float(loss_inv), float(ref_inv))

    # static-weights path
    loss_sw, _ = static_combo_loss(preds, targets, w_MSE=0.3, w_NLL=0.7)
    ref_sw = _reference_loss(preds, targets, w_MSE=0.3, w_NLL=0.7)
    assert jnp.allclose(loss_sw, ref_sw, rtol=1e-4, atol=1e-5), (float(loss_sw), float(ref_sw))

    # bf16 streaming path (inputs stay bf16 in HBM; kernel upcasts per block)
    preds_bf = preds.astype(jnp.bfloat16)
    targets_bf = targets.astype(jnp.bfloat16)
    loss_bf, _ = static_combo_loss(preds_bf, targets_bf)
    ref_bf = _reference_loss(preds_bf, targets_bf)
    assert jnp.allclose(loss_bf, ref_bf, rtol=1e-3, atol=1e-4), (float(loss_bf), float(ref_bf))

    # gradient check (custom VJP; weights stop_gradient'd like .detach())
    g_pallas = jax.grad(lambda pp: static_combo_loss(pp, targets)[0])(preds)
    g_ref = jax.grad(lambda pp: _reference_loss(pp, targets))(preds)
    assert jnp.allclose(g_pallas, g_ref, rtol=1e-4, atol=1e-6)

    # larger, exactly-tiled shape: exercises the unmasked, multi-block, 2-slice grid path
    shape2 = (8, 16, 64, 128)   # 1,048,576 elements = 8192 rows of 128
    p_big = jnp.exp(0.3 * jax.random.normal(k3, shape2, dtype=jnp.float32)) + 0.1
    t_big = jnp.square(jax.random.normal(k4, shape2, dtype=jnp.float32)) + 0.05
    loss_big, _ = static_combo_loss(p_big, t_big)
    jax.block_until_ready(loss_big)
    ref_big = _reference_loss(p_big, t_big)
    assert jnp.allclose(loss_big, ref_big, rtol=1e-4, atol=1e-5), (float(loss_big), float(ref_big))

    print("KERNEL_OK")
</pallas_src>

<mosaic_0001>
module attributes {stable_mosaic.version = 11 : i64} {
  func.func @_combo_sums_kernel(%arg0: i32, %arg1: i32, %arg2: memref<16x128xf32, #tpu.memory_space<vmem>>, %arg3: memref<16x128xf32, #tpu.memory_space<vmem>>, %arg4: memref<1x2x8x128xf32, #tpu.memory_space<vmem>>) attributes {dimension_semantics = [#tpu.dimension_semantics<parallel>, #tpu.dimension_semantics<arbitrary>], iteration_bounds = array<i64: 2, 1>, scalar_prefetch = 0 : i64, scratch_operands = 0 : i64, tpu.core_type = #tpu.core_type<tc>, window_params = [{transform_indices = @transform_0, window_bounds = array<i64: 16, 128>}, {transform_indices = @transform_1, window_bounds = array<i64: 16, 128>}, {transform_indices = @transform_2, window_bounds = array<i64: 1, 2, 8, 128>}]} {
    %c0_i32 = arith.constant 0 : i32
    %0 = arith.cmpi eq, %arg1, %c0_i32 : i32
    %1 = arith.extui %0 : i1 to i32
    %c0_i32_0 = arith.constant 0 : i32
    %2 = arith.cmpi ne, %1, %c0_i32_0 : i32
    scf.if %2 {
      %cst_22 = arith.constant 0.000000e+00 : f32
      %42 = vector.broadcast %cst_22 : f32 to vector<1x2x8x128xf32>
      %c0_23 = arith.constant 0 : index
      %c0_24 = arith.constant 0 : index
      %c0_25 = arith.constant 0 : index
      %c0_26 = arith.constant 0 : index
      %43 = vector.load %arg4[%c0_23, %c0_24, %c0_25, %c0_26] : memref<1x2x8x128xf32, #tpu.memory_space<vmem>>, vector<1x2x8x128xf32>
      tpu.vector_store %arg4[%c0_23, %c0_24, %c0_25, %c0_26], %42 {strides = array<i32>} : memref<1x2x8x128xf32, #tpu.memory_space<vmem>>, vector<1x2x8x128xf32>,
    } else {
    }
    %c0 = arith.constant 0 : index
    %c0_1 = arith.constant 0 : index
    %3 = vector.load %arg2[%c0, %c0_1] : memref<16x128xf32, #tpu.memory_space<vmem>>, vector<16x128xf32>
    %c0_2 = arith.constant 0 : index
    %c0_3 = arith.constant 0 : index
    %4 = vector.load %arg3[%c0_2, %c0_3] : memref<16x128xf32, #tpu.memory_space<vmem>>, vector<16x128xf32>
    %5 = arith.subf %3, %4 : vector<16x128xf32>
    %6 = arith.mulf %5, %5 : vector<16x128xf32>
    %7 = arith.divf %4, %3 : vector<16x128xf32>
    %8 = math.log %3 : vector<16x128xf32>
    %9 = arith.addf %7, %8 : vector<16x128xf32>
    %c1_i32 = arith.constant 1 : i32
    %10 = arith.muli %arg0, %c1_i32 : i32
    %11 = arith.addi %10, %arg1 : i32
    %c16_i32 = arith.constant 16 : i32
    %12 = arith.muli %11, %c16_i32 : i32
    %13 = tpu.iota {dimensions = array<i32: 0>} : vector<16x128xi32>
    %14 = tpu.iota {dimensions = array<i32: 1>} : vector<16x128xi32>
    %15 = vector.broadcast %12 : i32 to vector<16x128xi32>
    %16 = arith.addi %15, %13 : vector<16x128xi32>
    %c128_i32 = arith.constant 128 : i32
    %17 = vector.broadcast %c128_i32 : i32 to vector<16x128xi32>
    %18 = arith.muli %16, %17 : vector<16x128xi32>
    %19 = arith.addi %18, %14 : vector<16x128xi32>
    %c2048_i32 = arith.constant 2048 : i32
    %20 = vector.broadcast %c2048_i32 : i32 to vector<16x128xi32>
    %21 = arith.cmpi slt, %19, %20 : vector<16x128xi32>
    %cst = arith.constant 0.000000e+00 : f32
    %22 = vector.broadcast %cst : f32 to vector<16x128xf32>
    %23 = arith.select %21, %6, %22 : vector<16x128xi1>, vector<16x128xf32>
    %cst_4 = arith.constant 0.000000e+00 : f32
    %24 = vector.broadcast %cst_4 : f32 to vector<16x128xf32>
    %25 = arith.select %21, %9, %24 : vector<16x128xi1>, vector<16x128xf32>
    %26 = vector.shape_cast %23 : vector<16x128xf32> to vector<2x8x128xf32>
    %cst_5 = arith.constant dense<0.000000e+00> : vector<8x128xf32>
    %27 = vector.multi_reduction <add>, %26, %cst_5 [0] : vector<2x8x128xf32> to vector<8x128xf32>
    %28 = vector.shape_cast %25 : vector<16x128xf32> to vector<2x8x128xf32>
    %cst_6 = arith.constant dense<0.000000e+00> : vector<8x128xf32>
    %29 = vector.multi_reduction <add>, %28, %cst_6 [0] : vector<2x8x128xf32> to vector<8x128xf32>
    %c0_7 = arith.constant 0 : index
    %c0_8 = arith.constant 0 : index
    %c0_9 = arith.constant 0 : index
    %c0_10 = arith.constant 0 : index
    %30 = vector.load %arg4[%c0_7, %c0_8, %c0_9, %c0_10] : memref<1x2x8x128xf32, #tpu.memory_space<vmem>>, vector<1x1x8x128xf32>
    %31 = vector.shape_cast %30 : vector<1x1x8x128xf32> to vector<8x128xf32>
    %32 = arith.addf %31, %27 : vector<8x128xf32>
    %c0_11 = arith.constant 0 : index
    %c0_12 = arith.constant 0 : index
    %c0_13 = arith.constant 0 : index
    %c0_14 = arith.constant 0 : index
    %33 = vector.load %arg4[%c0_11, %c0_12, %c0_13, %c0_14] : memref<1x2x8x128xf32, #tpu.memory_space<vmem>>, vector<1x1x8x128xf32>
    %34 = vector.shape_cast %33 : vector<1x1x8x128xf32> to vector<8x128xf32>
    %35 = vector.shape_cast %32 : vector<8x128xf32> to vector<1x1x8x128xf32>
    tpu.vector_store %arg4[%c0_11, %c0_12, %c0_13, %c0_14], %35 {strides = array<i32>} : memref<1x2x8x128xf32, #tpu.memory_space<vmem>>, vector<1x1x8x128xf32>,
    %c0_15 = arith.constant 0 : index
    %c1 = arith.constant 1 : index
    %c0_16 = arith.constant 0 : index
    %c0_17 = arith.constant 0 : index
    %36 = vector.load %arg4[%c0_15, %c1, %c0_16, %c0_17] : memref<1x2x8x128xf32, #tpu.memory_space<vmem>>, vector<1x1x8x128xf32>
    %37 = vector.shape_cast %36 : vector<1x1x8x128xf32> to vector<8x128xf32>
    %38 = arith.addf %37, %29 : vector<8x128xf32>
    %c0_18 = arith.constant 0 : index
    %c1_19 = arith.constant 1 : index
    %c0_20 = arith.constant 0 : index
    %c0_21 = arith.constant 0 : index
    %39 = vector.load %arg4[%c0_18, %c1_19, %c0_20, %c0_21] : memref<1x2x8x128xf32, #tpu.memory_space<vmem>>, vector<1x1x8x128xf32>
    %40 = vector.shape_cast %39 : vector<1x1x8x128xf32> to vector<8x128xf32>
    %41 = vector.shape_cast %38 : vector<8x128xf32> to vector<1x1x8x128xf32>
    tpu.vector_store %arg4[%c0_18, %c1_19, %c0_20, %c0_21], %41 {strides = array<i32>} : memref<1x2x8x128xf32, #tpu.memory_space<vmem>>, vector<1x1x8x128xf32>,
    return
  }
  func.func @transform_0(%arg0: i32, %arg1: i32) -> (i32, i32) {
    %c1_i32 = arith.constant 1 : i32
    %0 = arith.muli %arg0, %c1_i32 : i32
    %1 = arith.addi %0, %arg1 : i32
    %c0_i32 = arith.constant 0 : i32
    %c0_i32_0 = arith.constant 0 : i32
    return %1, %c0_i32 : i32, i32
  }
  func.func @transform_1(%arg0: i32, %arg1: i32) -> (i32, i32) {
    %c1_i32 = arith.constant 1 : i32
    %0 = arith.muli %arg0, %c1_i32 : i32
    %1 = arith.addi %0, %arg1 : i32
    %c0_i32 = arith.constant 0 : i32
    %c0_i32_0 = arith.constant 0 : i32
    return %1, %c0_i32 : i32, i32
  }
  func.func @transform_2(%arg0: i32, %arg1: i32) -> (i32, i32, i32, i32) {
    %c0_i32 = arith.constant 0 : i32
    %c0_i32_0 = arith.constant 0 : i32
    %c0_i32_1 = arith.constant 0 : i32
    %c0_i32_2 = arith.constant 0 : i32
    return %arg0, %c0_i32, %c0_i32_0, %c0_i32_1 : i32, i32, i32, i32
  }
}

</mosaic_0001>

<llo_original>
// kernel: tpu_custom_call.1
$region0: #{tpu_custom_call.1}
  #allocation0 [shape = 'u32[]', space=smem, size = 0x4, offset = 0x4, fixed_abs, tag = 'smem constant byte address 0x4 - core index']
  #allocation1 [shape = 'u32[144,128]{1,0:T(1,128)}', space=vmem, size = 0x12000, scoped, tag = 'internal scratch']
  %s0 = inlined_call_operand.hbm [shape: f32[32,128], index: 0, kind: input, shape index: {}]
  %s1 = inlined_call_operand.hbm [shape: f32[32,128], index: 1, kind: input, shape index: {}]
  %s2 = inlined_call_operand.hbm [shape: f32[2,2,8,128], index: 2, kind: output, shape index: {}]
  %s3 = sld [smem:[#allocation0]]
  $region53: #{tpu_custom_call.1} parent=0
    _
  %s5 = ssub.s32 1, %s3
  %s6 = scalar_select 0, %s5, %s3
  $region1: #{tpu_custom_call.1} parent=0
    #allocation2 [shape = 'u8[16384]{0}', space=vmem, size = 0x4000, scoped, tag = 'input window, operand 0']
    #allocation3 [shape = 's32[2]{0}', space=sflag, size = 0x8, scoped, tag = 'scoped memory for tpu_custom_call.1']
    #allocation4 [shape = 's32[2]{0}', space=sflag, size = 0x8, scoped, tag = 'scoped memory for tpu_custom_call.1']
    #allocation5 [shape = 'u8[16384]{0}', space=vmem, size = 0x4000, scoped, tag = 'input window, operand 1']
    #allocation6 [shape = 's32[2]{0}', space=sflag, size = 0x8, scoped, tag = 'scoped memory for tpu_custom_call.1']
    #allocation7 [shape = 'u8[16384]{0}', space=vmem, size = 0x4000, scoped, tag = 'output window, operand 0']
    %7 = vsyncpa [#allocation3], 0
    %s8 = scalar_lea.sflag [#allocation3], 1
    %9 = vsyncpa %s8, 0
    %10 = vsyncpa [#allocation6], 0
    %s11 = scalar_lea.sflag [#allocation6], 1
    %12 = vsyncpa %s11, 0
    %13 = vsyncpa [#allocation4], 0
    %s14 = scalar_lea.sflag [#allocation4], 1
    %15 = vsyncpa %s14, 0
    loop: start=0, step=1, limit=4
    $region2: #{tpu_custom_call.1} parent=1 // loop_pre_header
      _
    $region3: #{tpu_custom_call.1} parent=1 // loop_header
      %s17 = sphi 0, %s21
      %p18 = scmp.ge.s32.totalorder %s17, 4
      %s24 = sphi 0, %s36
      %s25 = sphi 0, %s32
      %s26 = sphi 0, %s24
      %s27 = sphi 0, %s25
      %s28 = sphi 0, %s26
      %s29 = sphi 0, %s27
      %s41 = sphi 0, %s43
      %s44 = sphi 0, %s41
      %s45 = sphi 0, %s44
      %s61 = sphi 0, %s45
      %s69 = sphi 0, %s71
      %s72 = sphi 0, %s69
      %s73 = sphi 0, %s72
      %s89 = sphi 0, %s73
      %s95 = sphi 0, %s97
      %s98 = sphi 0, %s95
      %s99 = sphi 0, %s98
      %s115 = sphi 0, %s99
    $region4: #{tpu_custom_call.1} parent=1 // loop_header_branch
      %20 = sbr.rel (%p18) target = $region8
    $region5: #{tpu_custom_call.1} parent=1 // loop_body
      %s22 = ssub.s32 %s17, 1
      %s23 = ssub.s32 %s17, 2
      %s30 = sadd.s32 1, %s25
      %p31 = scmp.ge.s32.totalorder %s30, 1
      %s32 = scalar_select %p31, 0, %s30
      %s33 = sadd.s32 1, %s24
      %s34 = scalar_select %p31, %s33, %s24
      %p35 = scmp.ge.s32.totalorder %s34, 2
      %s36 = scalar_select %p35, 0, %s34
      %s37 = sadd.s32 %s24, %s25
      %s38 = sadd.s32 %s36, %s32
      %s39 = ssub.s32 %s37, %s38
      %p40 = scmp.eq.s32.totalorder %s39, 0
      %s42 = sadd.s32 %s41, 1
      %s43 = scalar_select %p40, %s41, %s42
      %p46 = pneg %p40
      %p47 = scmp.eq.s32.totalorder %s17, 1
      %p48 = por %p46, %p47
      %p49 = scmp.ne.s32.totalorder %s41, %s44
      %p50 = scmp.eq.s32.totalorder %s17, 0
      %p51 = por %p49, %p50
      %p52 = scmp.ne.s32.totalorder %s41, %s44
      %p53 = scmp.eq.s32.totalorder %s22, 1
      %p54 = por %p52, %p53
      %p55 = scmp.ne.s32.totalorder %s44, %s45
      %p56 = scmp.eq.s32.totalorder %s22, 0
      %p57 = por %p55, %p56
      %p58 = scmp.ne.s32.totalorder %s44, %s45
      %p59 = scmp.eq.s32.totalorder %s23, 1
      %p60 = por %p58, %p59
      %p62 = scmp.ne.s32.totalorder %s45, %s61
      %p63 = scmp.eq.s32.totalorder %s23, 0
      %p64 = por %p62, %p63
      %s65 = sadd.s32 %s24, %s25
      %s66 = sadd.s32 %s36, %s32
      %s67 = ssub.s32 %s65, %s66
      %p68 = scmp.eq.s32.totalorder %s67, 0
      %s70 = sadd.s32 %s69, 1
      %s71 = scalar_select %p68, %s69, %s70
      %p74 = pneg %p68
      %p75 = scmp.eq.s32.totalorder %s17, 1
      %p76 = por %p74, %p75
      %p77 = scmp.ne.s32.totalorder %s69, %s72
      %p78 = scmp.eq.s32.totalorder %s17, 0
      %p79 = por %p77, %p78
      %p80 = scmp.ne.s32.totalorder %s69, %s72
      %p81 = scmp.eq.s32.totalorder %s22, 1
      %p82 = por %p80, %p81
      %p83 = scmp.ne.s32.totalorder %s72, %s73
      %p84 = scmp.eq.s32.totalorder %s22, 0
      %p85 = por %p83, %p84
      %p86 = scmp.ne.s32.totalorder %s72, %s73
      %p87 = scmp.eq.s32.totalorder %s23, 1
      %p88 = por %p86, %p87
      %p90 = scmp.ne.s32.totalorder %s73, %s89
      %p91 = scmp.eq.s32.totalorder %s23, 0
      %p92 = por %p90, %p91
      %s93 = ssub.s32 %s24, %s36
      %p94 = scmp.eq.s32.totalorder %s93, 0
      %s96 = sadd.s32 %s95, 1
      %s97 = scalar_select %p94, %s95, %s96
      %p100 = pneg %p94
      %p101 = scmp.eq.s32.totalorder %s17, 1
      %p102 = por %p100, %p101
      %p103 = scmp.ne.s32.totalorder %s95, %s98
      %p104 = scmp.eq.s32.totalorder %s17, 0
      %p105 = por %p103, %p104
      %p106 = scmp.ne.s32.totalorder %s95, %s98
      %p107 = scmp.eq.s32.totalorder %s22, 1
      %p108 = por %p106, %p107
      %p109 = scmp.ne.s32.totalorder %s98, %s99
      %p110 = scmp.eq.s32.totalorder %s22, 0
      %p111 = por %p109, %p110
      %p112 = scmp.ne.s32.totalorder %s98, %s99
      %p113 = scmp.eq.s32.totalorder %s23, 1
      %p114 = por %p112, %p113
      %p116 = scmp.ne.s32.totalorder %s99, %s115
      %p117 = scmp.eq.s32.totalorder %s23, 0
      %p118 = por %p116, %p117
      %p119 = scmp.le.s32.totalorder 1, %s17
      %p120 = scmp.lt.s32.totalorder %s17, 3
      %p121 = pnand %p119, %p120
      %p122 = pneg %p121
      // Predicated region
      $region9: #{tpu_custom_call.1} parent=5 // pred_check
        _
      $region10: #{tpu_custom_call.1} parent=5 // pred_check_branch
        %124 = sbr.rel (%p121) target = $region12
      $region11: #{tpu_custom_call.1} parent=5 // pred_region
        %s125 = ssub.s32 %s17, 1
      $region12: #{tpu_custom_call.1} parent=5 // pred_fallthru
        _
      %p126 = scmp.lt.s32.totalorder %s17, 2
      // Predicated region
      $region13: #{tpu_custom_call.1} parent=5 // pred_check
        %p127 = pneg %p126
      $region14: #{tpu_custom_call.1} parent=5 // pred_check_branch
        %129 = sbr.rel (%p127) target = $region16
      $region15: #{tpu_custom_call.1} parent=5 // pred_region
        // Predicated region
        $region17: #{tpu_custom_call.1} parent=15 // pred_check
          %p130 = pneg %p51
        $region18: #{tpu_custom_call.1} parent=15 // pred_check_branch
          %132 = sbr.rel (%p130) target = $region20
        $region19: #{tpu_custom_call.1} parent=15 // pred_region
          %s133 = sand.u32 %s41, 1
          %s134 = scalar_lea.sflag [#allocation3], %s133
          %s135 = sand.u32 %s41, 1
          %s136 = smul.addr %s135, 16
          %s137 = scalar_lea.vmem [#allocation2], %s136
          %s138 = sadd.s32 %s24, %s25
          %s139 = smul.u32 2, %s138
          %s141 = ssub.s32 256, 256
          %142 = vsyncadd %s134, %s141
          %s143 = smul.addr %s139, 128
          %s144 = scalar_lea.hbm %s0, %s143
          %s145 = sshll.u32 %s137, 4
          %s146 = int_to_ptr.vmem [resolvable:$true] %s145
          %151 = dma.hbm_to_vmem [thread:$0]  %s144, 256, %s146, %s134, 128, 128, 8
        $region20: #{tpu_custom_call.1} parent=15 // pred_fallthru
          _
        // Predicated region
        $region21: #{tpu_custom_call.1} parent=15 // pred_check
          %p152 = pneg %p79
        $region22: #{tpu_custom_call.1} parent=15 // pred_check_branch
          %154 = sbr.rel (%p152) target = $region24
        $region23: #{tpu_custom_call.1} parent=15 // pred_region
          %s155 = sand.u32 %s69, 1
          %s156 = scalar_lea.sflag [#allocation6], %s155
          %s157 = sand.u32 %s69, 1
          %s158 = smul.addr %s157, 16
          %s159 = scalar_lea.vmem [#allocation5], %s158
          %s160 = sadd.s32 %s24, %s25
          %s161 = smul.u32 2, %s160
          %s163 = ssub.s32 256, 256
          %164 = vsyncadd %s156, %s163
          %s165 = smul.addr %s161, 128
          %s166 = scalar_lea.hbm %s1, %s165
          %s167 = sshll.u32 %s159, 4
          %s168 = int_to_ptr.vmem [resolvable:$true] %s167
          %173 = dma.hbm_to_vmem [thread:$0]  %s166, 256, %s168, %s156, 128, 128, 8
        $region24: #{tpu_custom_call.1} parent=15 // pred_fallthru
          _
      $region16: #{tpu_custom_call.1} parent=5 // pred_fallthru
        _
      %p174 = scmp.le.s32.totalorder 1, %s17
      %p175 = scmp.lt.s32.totalorder %s17, 3
      %p176 = pnand %p174, %p175
      %p177 = pneg %p176
      // Predicated region
      $region25: #{tpu_custom_call.1} parent=5 // pred_check
        _
      $region26: #{tpu_custom_call.1} parent=5 // pred_check_branch
        %179 = sbr.rel (%p176) target = $region28
      $region27: #{tpu_custom_call.1} parent=5 // pred_region
        %s180 = ssub.s32 %s17, 1
        %s181 = sand.u32 %s44, 1
        %s182 = scalar_lea.sflag [#allocation3], %s181
        %s183 = sand.u32 %s44, 1
        %s184 = smul.addr %s183, 16
        %s185 = scalar_lea.vmem [#allocation2], %s184
        // Predicated region
        $region29: #{tpu_custom_call.1} parent=27 // pred_check
          %p186 = pneg %p57
        $region30: #{tpu_custom_call.1} parent=27 // pred_check_branch
          %188 = sbr.rel (%p186) target = $region32
        $region31: #{tpu_custom_call.1} parent=27 // pred_region
          %189 = dma.done %s182, 256
        $region32: #{tpu_custom_call.1} parent=27 // pred_fallthru
          _
        %s190 = sand.u32 %s72, 1
        %s191 = scalar_lea.sflag [#allocation6], %s190
        %s192 = sand.u32 %s72, 1
        %s193 = smul.addr %s192, 16
        %s194 = scalar_lea.vmem [#allocation5], %s193
        // Predicated region
        $region33: #{tpu_custom_call.1} parent=27 // pred_check
          %p195 = pneg %p85
        $region34: #{tpu_custom_call.1} parent=27 // pred_check_branch
          %197 = sbr.rel (%p195) target = $region36
        $region35: #{tpu_custom_call.1} parent=27 // pred_region
          %198 = dma.done %s191, 256
        $region36: #{tpu_custom_call.1} parent=27 // pred_fallthru
          _
        %s199 = sand.u32 %s44, 1
        %s200 = scalar_lea.sflag [#allocation3], %s199
        %s201 = sand.u32 %s44, 1
        %s202 = smul.addr %s201, 16
        %s203 = scalar_lea.vmem [#allocation2], %s202
        %p204 = pneg %p57
        %p205 = pneg %p54
        %s206 = sand.u32 %s72, 1
        %s207 = scalar_lea.sflag [#allocation6], %s206
        %s208 = sand.u32 %s72, 1
        %s209 = smul.addr %s208, 16
        %s210 = scalar_lea.vmem [#allocation5], %s209
        %p211 = pneg %p85
        %p212 = pneg %p82
        %p213 = pneg %p111
        %p214 = pneg %p108
        %s215 = sand.u32 %s98, 1
        %s216 = scalar_lea.sflag [#allocation4], %s215
        %s217 = sand.u32 %s98, 1
        %s218 = smul.addr %s217, 16
        %s219 = scalar_lea.vmem [#allocation7], %s218
        %s220 = sadd.s32 %s26, %s27
        %s221 = smul.u32 2, %s220
        %s222 = sadd.s32 %s26, %s27
        %s223 = smul.u32 2, %s222
        %p224 = scmp.eq.s32.totalorder %s27, 0
        // Predicated region
        $region37: #{tpu_custom_call.1} parent=27 // pred_check
          %p225 = pneg %p224
        $region38: #{tpu_custom_call.1} parent=27 // pred_check_branch
          %227 = sbr.rel (%p225) target = $region40
        $region39: #{tpu_custom_call.1} parent=27 // pred_region
          %228 = vst [vmem:[%s219] sm:$0xff] 0.0
          %229 = vst [vmem:[%s219 + $0x8] sm:$0xff] 0.0
        $region40: #{tpu_custom_call.1} parent=27 // pred_fallthru
          _
        %v230 = vld [vmem:[%s185] sm:$0xff]
        %v231 = vld [vmem:[%s185 + $0x8] sm:$0xff]
        %v232 = vld [vmem:[%s194] sm:$0xff]
        %v233 = vld [vmem:[%s194 + $0x8] sm:$0xff]
        %v234 = vsub.f32 %v230, %v232
        %v235 = vsub.f32 %v231, %v233
        %v236 = vmul.f32 %v234, %v234
        %v237 = vmul.f32 %v235, %v235
        %v238 = vrcp.pop %v230
        %v239 = vmul.f32 %v232, %v238
        %v240 = vrcp.pop %v231
        %v241 = vmul.f32 %v233, %v240
        %v242 = vlog2.pop %v230
        %v243 = vmul.f32 %v242, 0.6931472
        %v244 = vlog2.pop %v231
        %v245 = vmul.f32 %v244, 0.6931472
        %v246 = vadd.f32 %v239, %v243
        %v247 = vadd.f32 %v241, %v245
        %s248 = sadd.s32 %s26, %s27
        %s249 = smul.u32 %s248, 16
        %v250 = vlaneseq
        %v251 = vshrl.u32 %v250, 7
        %v252 = vadd.s32 %v251, 8
        %v253 = vlaneseq
        %v254 = vand.u32 %v253, 127
        %v255 = vstv %s249
        %v256 = vadd.s32 %v255, %v251
        %v257 = vadd.s32 %v255, %v252
        %v258 = vmul.u32 %v256, 128
        %v259 = vmul.u32 %v257, 128
        %v260 = vadd.s32 %v258, %v254
        %v261 = vadd.s32 %v259, %v254
        %vm262 = vcmp.lt.s32.totalorder %v260, 2048
        %vm263 = vcmp.lt.s32.totalorder %v261, 2048
        %v264 = vsel %vm262, %v236, 0.0
        %v265 = vsel %vm263, %v237, 0.0
        %v266 = vsel %vm262, %v246, 0.0
        %v267 = vsel %vm263, %v247, 0.0
        %v268 = vadd.f32 %v264, %v265
        %v269 = vadd.f32 %v266, %v267
        %v270 = vld [vmem:[%s219] sm:$0xff]
        %v271 = vadd.f32 %v270, %v268
        %272 = vst [vmem:[%s219] sm:$0xff] %v271
        %s273 = scalar_lea.vmem %s219, 8 [#allocation7]
        %v274 = vld [vmem:[%s273] sm:$0xff]
        %v275 = vadd.f32 %v274, %v269
        %276 = vst [vmem:[%s273] sm:$0xff] %v275
        %s277 = sand.u32 %s98, 1
        %s278 = scalar_lea.sflag [#allocation4], %s277
        %s279 = sand.u32 %s98, 1
        %s280 = smul.addr %s279, 16
        %s281 = scalar_lea.vmem [#allocation7], %s280
        // Predicated region
        $region41: #{tpu_custom_call.1} parent=27 // pred_check
          %p282 = pneg %p108
        $region42: #{tpu_custom_call.1} parent=27 // pred_check_branch
          %284 = sbr.rel (%p282) target = $region44
        $region43: #{tpu_custom_call.1} parent=27 // pred_region
          %s286 = ssub.s32 256, 256
          %287 = vsyncadd %s278, %s286
          %s288 = smul.addr %s26, 2
          %s289 = smul.addr %s288, 128
          %s290 = scalar_lea.hbm %s2, %s289
          %s291 = sshll.u32 %s281, 4
          %s292 = int_to_ptr.vmem [resolvable:$true] %s291
          %297 = dma.vmem_to_hbm [thread:$0]  %s292, 256, %s290, %s278, 128, 128, 8
        $region44: #{tpu_custom_call.1} parent=27 // pred_fallthru
          _
      $region28: #{tpu_custom_call.1} parent=5 // pred_fallthru
        _
      %p298 = scmp.le.s32.totalorder 2, %s17
      // Predicated region
      $region45: #{tpu_custom_call.1} parent=5 // pred_check
        %p299 = pneg %p298
      $region46: #{tpu_custom_call.1} parent=5 // pred_check_branch
        %301 = sbr.rel (%p299) target = $region48
      $region47: #{tpu_custom_call.1} parent=5 // pred_region
        %s302 = ssub.s32 %s17, 2
        // Predicated region
        $region49: #{tpu_custom_call.1} parent=47 // pred_check
          %p303 = pneg %p114
        $region50: #{tpu_custom_call.1} parent=47 // pred_check_branch
          %305 = sbr.rel (%p303) target = $region52
        $region51: #{tpu_custom_call.1} parent=47 // pred_region
          %s306 = sand.u32 %s99, 1
          %s307 = scalar_lea.sflag [#allocation4], %s306
          %s308 = sand.u32 %s99, 1
          %s309 = smul.addr %s308, 16
          %s310 = scalar_lea.vmem [#allocation7], %s309
          %311 = dma.done %s307, 256
        $region52: #{tpu_custom_call.1} parent=47 // pred_fallthru
          _
      $region48: #{tpu_custom_call.1} parent=5 // pred_fallthru
        _
    $region6: #{tpu_custom_call.1} parent=1 // loop_footer
      %s21 = sadd.s32 1, %s17
    $region7: #{tpu_custom_call.1} parent=1 // loop_footer_branch
      %16 = sbr.rel target = $region3
    $region8: #{tpu_custom_call.1} parent=1 // loop_exit
      _
    %312 = vsyncpa [#allocation3], 1
    %s313 = scalar_lea.sflag [#allocation3], 1
    %314 = vsyncpa %s313, 1
    %315 = vsyncpa [#allocation6], 1
    %s316 = scalar_lea.sflag [#allocation6], 1
    %317 = vsyncpa %s316, 1
    %318 = vsyncpa [#allocation4], 1
    %s319 = scalar_lea.sflag [#allocation4], 1
    %320 = vsyncpa %s319, 1

</llo_original>
